<compile_context>
chip_gen: v6e
topology: v6e:2x2x1
jax: 0.10.0
libtpu: 0.0.40
codegen_flags: <defaults>
</compile_context>

<pallas_src>
import jax
import jax.numpy as jnp
from jax import lax
from jax.experimental import pallas as pl
from jax.experimental.pallas import tpu as pltpu

K_IN = 28 * 28     # 784, fc0 contraction dim (unpadded -> no zero K rows on MXU)
C_PAD = 128        # channels 32 -> 128 (lane-dense hidden width)
O_PAD = 128        # logits 10 -> 128   (lane-dense output => unmasked vst)
NEG_PAD = -1e30    # effective -inf for padded logit columns (exp underflows to 0)


def _round_up(n, m):
    return (n + m - 1) // m * m


def mlp_kernel(x_ref, w0_ref, b0_ref, wc_ref, bc_ref, wo_ref, bo_ref, out_ref):
    # x arrives as raw f32 [TB, 784] straight from HBM (no staging pad/cast in
    # the wrapper); cast to bf16 only in-register, right before the MXU op.
    x = x_ref[...].astype(jnp.bfloat16)

    # fc0 + sigmoid. bf16 operands, f32 accumulation (MXU native path).
    h = jnp.dot(x, w0_ref[...], preferred_element_type=jnp.float32)
    h = jax.nn.sigmoid(h + b0_ref[...])

    # Hidden stack collapsed in the wrapper (no inter-layer activation in the
    # reference) -> a single matmul, then the one sigmoid after the stack.
    h = jnp.dot(h.astype(jnp.bfloat16), wc_ref[...],
                preferred_element_type=jnp.float32)
    h = jax.nn.sigmoid(h + bc_ref[...])

    # Output projection. Padded logit columns carry bias NEG_PAD (~ -inf).
    y = jnp.dot(h.astype(jnp.bfloat16), wo_ref[...],
                preferred_element_type=jnp.float32) + bo_ref[...]

    # Numerically stable log_softmax along dim=1; padded columns contribute 0.
    m = jnp.max(y, axis=1, keepdims=True)
    z = y - m
    lse = jnp.log(jnp.sum(jnp.exp(z), axis=1, keepdims=True))
    out_ref[...] = (z - lse).astype(out_ref.dtype)   # bf16 store, 128-lane dense


def _prepare_params(params):
    """Collapse the activation-free hidden stack, pad channel dims, cast to bf16.

    Padding invariants the kernel correctness relies on (do not change lightly):
      * b0p / bcp padded lanes are ZERO, so padded hidden lanes become
        sigmoid(0) = 0.5 -- harmless ONLY because the padded *rows* of
        wcp / wop are exactly zero (jnp.pad default).
      * bop padded logit lanes are NEG_PAD (~ -inf), so exp() underflows to 0
        and log_softmax over 128 lanes equals log_softmax over the real 10.
    """
    w0, b0, wl, bl, wout, bout = params
    L = wl.shape[0]

    # ((h@W0+b0)@W1+b1)...  ==  h @ (W0@...@W_{L-1}) + folded bias  (f32, HIGHEST)
    wc = wl[0].astype(jnp.float32)
    bc = bl[0].astype(jnp.float32)
    for l in range(1, L):
        wc = jnp.dot(wc, wl[l], precision=lax.Precision.HIGHEST)
        bc = jnp.dot(bc, wl[l], precision=lax.Precision.HIGHEST) + bl[l]

    def pad2(a, rows, cols):
        return jnp.pad(a.astype(jnp.float32),
                       ((0, rows - a.shape[0]), (0, cols - a.shape[1])))

    w0p = pad2(w0, K_IN, C_PAD).astype(jnp.bfloat16)   # [784, 128], K unpadded
    b0p = pad2(b0, 1, C_PAD)                           # f32
    wcp = pad2(wc, C_PAD, C_PAD).astype(jnp.bfloat16)  # padded rows are zero
    bcp = pad2(bc, 1, C_PAD)                           # f32
    wop = pad2(wout, C_PAD, O_PAD).astype(jnp.bfloat16)  # padded rows are zero
    bop = jnp.full((1, O_PAD), NEG_PAD, jnp.float32)
    bop = bop.at[:, : bout.shape[1]].set(bout.astype(jnp.float32))
    return w0p, b0p, wcp, bcp, wop, bop


def _choose_tile(B):
    """Batch tile size.

    Large tiles (~1024 rows) amortize the ~0.35 us per-grid-step overhead and
    issue bigger DMAs; for B beyond one tile the tile count is kept even so the
    "parallel" batch axis load-balances across v7x's 2 TensorCores.  VMEM is a
    non-issue (x tile at 1024 rows f32 is ~3 MB double-buffered).
    """
    TARGET = 1024
    b8 = _round_up(max(B, 1), 8)
    if b8 <= 256:
        return b8                       # tiny batch: one tile, no padding waste
    n = max(2, pl.cdiv(b8, TARGET))
    n = _round_up(n, 2)                 # even tile count -> both v7x TCs busy
    return _round_up(pl.cdiv(b8, n), 8)


def mlp_forward(x, params):
    """x: [B, 1, 28, 28] (or anything reshapeable to [-1, 784]); returns [B, 10] f32."""
    w0p, b0p, wcp, bcp, wop, bop = _prepare_params(params)

    # Reshape only -- no pad/cast staging pass over x in HBM.
    x2d = x.reshape(-1, K_IN).astype(jnp.float32)
    B = x2d.shape[0]
    TB = _choose_tile(B)
    n_tiles = pl.cdiv(B, TB)
    B_pad = n_tiles * TB                # output rows; last x tile may read OOB
                                        # rows (unspecified values), those output
                                        # rows are discarded by the slice below.

    const = lambda i: (0, 0)            # weights stay VMEM-resident across tiles
    out = pl.pallas_call(
        mlp_kernel,
        out_shape=jax.ShapeDtypeStruct((B_pad, O_PAD), jnp.bfloat16),
        grid=(n_tiles,),
        in_specs=[
            pl.BlockSpec((TB, K_IN), lambda i: (i, 0)),    # x tile (f32, full 784 cols)
            pl.BlockSpec((K_IN, C_PAD), const),            # w0   (full, resident)
            pl.BlockSpec((1, C_PAD), const),               # b0
            pl.BlockSpec((C_PAD, C_PAD), const),           # W_comb
            pl.BlockSpec((1, C_PAD), const),               # b_comb
            pl.BlockSpec((C_PAD, O_PAD), const),           # w_out
            pl.BlockSpec((1, O_PAD), const),               # b_out (pads = -1e30)
        ],
        out_specs=pl.BlockSpec((TB, O_PAD), lambda i: (i, 0)),
        compiler_params=pltpu.CompilerParams(
            dimension_semantics=("parallel",)),
    )(x2d, w0p, b0p, wcp, bcp, wop, bop)

    # Only out[:, :10] is meaningful; padded logit lanes hold ~-inf garbage.
    return out[:B, :10].astype(jnp.float32)


def init_params(key, num_layers=5, channels=32):
    """Deterministic PyTorch-Linear-style init: U(-1/sqrt(fan_in), 1/sqrt(fan_in))."""
    ks = jax.random.split(key, 6)

    def uniform(k, shape, fan_in):
        bound = 1.0 / jnp.sqrt(fan_in)
        return jax.random.uniform(k, shape, jnp.float32, -bound, bound)

    w0 = uniform(ks[0], (K_IN, channels), K_IN)                      # [in, out]
    b0 = uniform(ks[1], (1, channels), K_IN)                         # [1, out]
    wl = uniform(ks[2], (num_layers, channels, channels), channels)  # [L, in, out]
    bl = uniform(ks[3], (num_layers, 1, channels), channels)         # [L, 1, out]
    wout = uniform(ks[4], (channels, 10), channels)                  # [in, out]
    bout = uniform(ks[5], (1, 10), channels)                         # [1, out]
    return w0, b0, wl, bl, wout, bout


def mlp_reference(x, params):
    """Pure-JAX f32 reference matching the PyTorch forward exactly."""
    w0, b0, wl, bl, wout, bout = params
    h = x.reshape(-1, K_IN).astype(jnp.float32)
    h = jax.nn.sigmoid(jnp.dot(h, w0, precision=lax.Precision.HIGHEST) + b0)
    for l in range(wl.shape[0]):
        h = jnp.dot(h, wl[l], precision=lax.Precision.HIGHEST) + bl[l]
    h = jax.nn.sigmoid(h)
    y = jnp.dot(h, wout, precision=lax.Precision.HIGHEST) + bout
    return jax.nn.log_softmax(y, axis=1)


if __name__ == "__main__":
    key = jax.random.PRNGKey(0)
    kx, kp = jax.random.split(key)

    # Small MNIST-like batch: [batch, 1, 28, 28]
    x = jax.random.normal(kx, (2, 1, 28, 28), jnp.float32)
    params = init_params(kp, num_layers=5, channels=32)

    out = jax.block_until_ready(mlp_forward(x, params))
    assert out.shape == (2, 10)

    # Sanity: log_softmax rows should exp-sum to ~1 (bf16 output store => looser tol).
    row_sums = jnp.sum(jnp.exp(out), axis=1)
    assert bool(jnp.all(jnp.abs(row_sums - 1.0) < 2e-2))

    # Correctness vs. pure-JAX f32 reference (bf16 MXU operands + bf16 output).
    ref = mlp_reference(x, params)
    assert bool(jnp.all(jnp.abs(out - ref) < 7.5e-2))

    print("KERNEL_OK")
</pallas_src>

<mosaic_0001>
module attributes {stable_mosaic.version = 11 : i64} {
  func.func @mlp_kernel(%arg0: i32, %arg1: memref<8x784xf32, #tpu.memory_space<vmem>>, %arg2: memref<784x128xbf16, #tpu.memory_space<vmem>>, %arg3: memref<1x128xf32, #tpu.memory_space<vmem>>, %arg4: memref<128x128xbf16, #tpu.memory_space<vmem>>, %arg5: memref<1x128xf32, #tpu.memory_space<vmem>>, %arg6: memref<128x128xbf16, #tpu.memory_space<vmem>>, %arg7: memref<1x128xf32, #tpu.memory_space<vmem>>, %arg8: memref<8x128xbf16, #tpu.memory_space<vmem>>) attributes {dimension_semantics = [#tpu.dimension_semantics<parallel>], iteration_bounds = array<i64: 1>, scalar_prefetch = 0 : i64, scratch_operands = 0 : i64, tpu.core_type = #tpu.core_type<tc>, window_params = [{transform_indices = @transform_0, window_bounds = array<i64: 8, 784>}, {pipeline_mode = #tpu.pipeline_mode<synchronous>, transform_indices = @transform_1, window_bounds = array<i64: 784, 128>}, {pipeline_mode = #tpu.pipeline_mode<synchronous>, transform_indices = @transform_2, window_bounds = array<i64: 1, 128>}, {pipeline_mode = #tpu.pipeline_mode<synchronous>, transform_indices = @transform_3, window_bounds = array<i64: 128, 128>}, {pipeline_mode = #tpu.pipeline_mode<synchronous>, transform_indices = @transform_4, window_bounds = array<i64: 1, 128>}, {pipeline_mode = #tpu.pipeline_mode<synchronous>, transform_indices = @transform_5, window_bounds = array<i64: 128, 128>}, {pipeline_mode = #tpu.pipeline_mode<synchronous>, transform_indices = @transform_6, window_bounds = array<i64: 1, 128>}, {transform_indices = @transform_7, window_bounds = array<i64: 8, 128>}]} {
    %c0 = arith.constant 0 : index
    %c0_0 = arith.constant 0 : index
    %0 = vector.load %arg1[%c0, %c0_0] : memref<8x784xf32, #tpu.memory_space<vmem>>, vector<8x784xf32>
    %1 = arith.truncf %0 : vector<8x784xf32> to vector<8x784xbf16>
    %c0_1 = arith.constant 0 : index
    %c0_2 = arith.constant 0 : index
    %2 = vector.load %arg2[%c0_1, %c0_2] : memref<784x128xbf16, #tpu.memory_space<vmem>>, vector<784x128xbf16>
    %cst = arith.constant dense<0.000000e+00> : vector<8x128xf32>
    %3 = tpu.matmul %1, %2, %cst {dimension_numbers = #tpu.dot_dimension_numbers<[1], [0], [0], [1], [0, 0, 1, 1], [], []>} : vector<8x784xbf16>, vector<784x128xbf16>, vector<8x128xf32> -> vector<8x128xf32>
    %c0_3 = arith.constant 0 : index
    %c0_4 = arith.constant 0 : index
    %4 = vector.load %arg3[%c0_3, %c0_4] : memref<1x128xf32, #tpu.memory_space<vmem>>, vector<1x128xf32>
    %5 = vector.broadcast %4 : vector<1x128xf32> to vector<8x128xf32>
    %6 = arith.addf %3, %5 : vector<8x128xf32>
    %7 = arith.negf %6 : vector<8x128xf32>
    %8 = math.exp %7 : vector<8x128xf32>
    %cst_5 = arith.constant 1.000000e+00 : f32
    %9 = vector.broadcast %cst_5 : f32 to vector<8x128xf32>
    %10 = arith.addf %9, %8 : vector<8x128xf32>
    %11 = arith.divf %9, %10 : vector<8x128xf32>
    %12 = arith.truncf %11 : vector<8x128xf32> to vector<8x128xbf16>
    %c0_6 = arith.constant 0 : index
    %c0_7 = arith.constant 0 : index
    %13 = vector.load %arg4[%c0_6, %c0_7] : memref<128x128xbf16, #tpu.memory_space<vmem>>, vector<128x128xbf16>
    %cst_8 = arith.constant dense<0.000000e+00> : vector<8x128xf32>
    %14 = tpu.matmul %12, %13, %cst_8 {dimension_numbers = #tpu.dot_dimension_numbers<[1], [0], [0], [1], [0, 0, 1, 1], [], []>} : vector<8x128xbf16>, vector<128x128xbf16>, vector<8x128xf32> -> vector<8x128xf32>
    %c0_9 = arith.constant 0 : index
    %c0_10 = arith.constant 0 : index
    %15 = vector.load %arg5[%c0_9, %c0_10] : memref<1x128xf32, #tpu.memory_space<vmem>>, vector<1x128xf32>
    %16 = vector.broadcast %15 : vector<1x128xf32> to vector<8x128xf32>
    %17 = arith.addf %14, %16 : vector<8x128xf32>
    %18 = arith.negf %17 : vector<8x128xf32>
    %19 = math.exp %18 : vector<8x128xf32>
    %cst_11 = arith.constant 1.000000e+00 : f32
    %20 = vector.broadcast %cst_11 : f32 to vector<8x128xf32>
    %21 = arith.addf %20, %19 : vector<8x128xf32>
    %22 = arith.divf %20, %21 : vector<8x128xf32>
    %23 = arith.truncf %22 : vector<8x128xf32> to vector<8x128xbf16>
    %c0_12 = arith.constant 0 : index
    %c0_13 = arith.constant 0 : index
    %24 = vector.load %arg6[%c0_12, %c0_13] : memref<128x128xbf16, #tpu.memory_space<vmem>>, vector<128x128xbf16>
    %cst_14 = arith.constant dense<0.000000e+00> : vector<8x128xf32>
    %25 = tpu.matmul %23, %24, %cst_14 {dimension_numbers = #tpu.dot_dimension_numbers<[1], [0], [0], [1], [0, 0, 1, 1], [], []>} : vector<8x128xbf16>, vector<128x128xbf16>, vector<8x128xf32> -> vector<8x128xf32>
    %c0_15 = arith.constant 0 : index
    %c0_16 = arith.constant 0 : index
    %26 = vector.load %arg7[%c0_15, %c0_16] : memref<1x128xf32, #tpu.memory_space<vmem>>, vector<1x128xf32>
    %27 = vector.broadcast %26 : vector<1x128xf32> to vector<8x128xf32>
    %28 = arith.addf %25, %27 : vector<8x128xf32>
    %cst_17 = arith.constant dense<0xFF800000> : vector<8xf32>
    %29 = vector.multi_reduction <maximumf>, %28, %cst_17 [1] : vector<8x128xf32> to vector<8xf32>
    %30 = vector.shape_cast %29 : vector<8xf32> to vector<8x1xf32>
    %31 = vector.broadcast %30 : vector<8x1xf32> to vector<8x128xf32>
    %32 = arith.subf %28, %31 : vector<8x128xf32>
    %33 = math.exp %32 : vector<8x128xf32>
    %cst_18 = arith.constant dense<0.000000e+00> : vector<8xf32>
    %34 = vector.multi_reduction <add>, %33, %cst_18 [1] : vector<8x128xf32> to vector<8xf32>
    %35 = vector.shape_cast %34 : vector<8xf32> to vector<8x1xf32>
    %36 = math.log %35 : vector<8x1xf32>
    %37 = vector.broadcast %36 : vector<8x1xf32> to vector<8x128xf32>
    %38 = arith.subf %32, %37 : vector<8x128xf32>
    %39 = arith.truncf %38 : vector<8x128xf32> to vector<8x128xbf16>
    %c0_19 = arith.constant 0 : index
    %c0_20 = arith.constant 0 : index
    %40 = vector.load %arg8[%c0_19, %c0_20] : memref<8x128xbf16, #tpu.memory_space<vmem>>, vector<8x128xbf16>
    tpu.vector_store %arg8[%c0_19, %c0_20], %39 {strides = array<i32>} : memref<8x128xbf16, #tpu.memory_space<vmem>>, vector<8x128xbf16>,
    return
  }
  func.func @transform_0(%arg0: i32) -> (i32, i32) {
    %c0_i32 = arith.constant 0 : i32
    %c0_i32_0 = arith.constant 0 : i32
    return %arg0, %c0_i32 : i32, i32
  }
  func.func @transform_1(%arg0: i32) -> (i32, i32) {
    %c0_i32 = arith.constant 0 : i32
    %c0_i32_0 = arith.constant 0 : i32
    %c0_i32_1 = arith.constant 0 : i32
    return %c0_i32, %c0_i32_0 : i32, i32
  }
  func.func @transform_2(%arg0: i32) -> (i32, i32) {
    %c0_i32 = arith.constant 0 : i32
    %c0_i32_0 = arith.constant 0 : i32
    %c0_i32_1 = arith.constant 0 : i32
    return %c0_i32, %c0_i32_0 : i32, i32
  }
  func.func @transform_3(%arg0: i32) -> (i32, i32) {
    %c0_i32 = arith.constant 0 : i32
    %c0_i32_0 = arith.constant 0 : i32
    %c0_i32_1 = arith.constant 0 : i32
    return %c0_i32, %c0_i32_0 : i32, i32
  }
  func.func @transform_4(%arg0: i32) -> (i32, i32) {
    %c0_i32 = arith.constant 0 : i32
    %c0_i32_0 = arith.constant 0 : i32
    %c0_i32_1 = arith.constant 0 : i32
    return %c0_i32, %c0_i32_0 : i32, i32
  }
  func.func @transform_5(%arg0: i32) -> (i32, i32) {
    %c0_i32 = arith.constant 0 : i32
    %c0_i32_0 = arith.constant 0 : i32
    %c0_i32_1 = arith.constant 0 : i32
    return %c0_i32, %c0_i32_0 : i32, i32
  }
  func.func @transform_6(%arg0: i32) -> (i32, i32) {
    %c0_i32 = arith.constant 0 : i32
    %c0_i32_0 = arith.constant 0 : i32
    %c0_i32_1 = arith.constant 0 : i32
    return %c0_i32, %c0_i32_0 : i32, i32
  }
  func.func @transform_7(%arg0: i32) -> (i32, i32) {
    %c0_i32 = arith.constant 0 : i32
    %c0_i32_0 = arith.constant 0 : i32
    return %arg0, %c0_i32 : i32, i32
  }
}

</mosaic_0001>

<llo_original>
// kernel: tpu_custom_call.1
$region0: #{tpu_custom_call.1}
  #allocation0 [shape = 'u32[]', space=smem, size = 0x4, offset = 0x4, fixed_abs, tag = 'smem constant byte address 0x4 - core index']
  #allocation1 [shape = 'u32[144,128]{1,0:T(1,128)}', space=vmem, size = 0x12000, scoped, tag = 'internal scratch']
  %s0 = inlined_call_operand.hbm [shape: f32[2,784], index: 0, kind: input, shape index: {}]
  %s1 = inlined_call_operand.hbm [shape: bf16[784,128], index: 1, kind: input, shape index: {}]
  %s2 = inlined_call_operand.vmem [shape: f32[1,128], index: 2, kind: input, shape index: {}]
  %s3 = inlined_call_operand.hbm [shape: bf16[128,128], index: 3, kind: input, shape index: {}]
  %s4 = inlined_call_operand.vmem [shape: f32[1,128], index: 4, kind: input, shape index: {}]
  %s5 = inlined_call_operand.hbm [shape: bf16[128,128], index: 5, kind: input, shape index: {}]
  %s6 = inlined_call_operand.vmem [shape: f32[1,128], index: 6, kind: input, shape index: {}]
  %s7 = inlined_call_operand.hbm [shape: bf16[8,128], index: 7, kind: output, shape index: {}]
  %s8 = sld [smem:[#allocation0]]
  $region54: #{tpu_custom_call.1} parent=0
    _
  %s10 = ssub.s32 1, %s8
  %s11 = scalar_select 0, %s10, %s8
  $region1: #{tpu_custom_call.1} parent=0
    #allocation2 [shape = 'u8[28672]{0}', space=vmem, size = 0x7000, scoped, tag = 'input window, operand 0, single buffered']
    #allocation3 [shape = 's32[1]{0}', space=sflag, size = 0x4, scoped, tag = 'scoped memory for tpu_custom_call.1']
    #allocation4 [shape = 's32[1]{0}', space=sflag, size = 0x4, scoped, tag = 'scoped memory for tpu_custom_call.1']
    #allocation5 [shape = 'u8[200704]{0}', space=vmem, size = 0x31000, scoped, tag = 'input window, operand 1, single buffered']
    #allocation6 [shape = 's32[1]{0}', space=sflag, size = 0x4, scoped, tag = 'scoped memory for tpu_custom_call.1']
    #allocation7 [shape = 'u8[32768]{0}', space=vmem, size = 0x8000, scoped, tag = 'input window, operand 3, single buffered']
    #allocation8 [shape = 'u8[32768]{0}', space=vmem, size = 0x8000, scoped, tag = 'input window, operand 5, single buffered']
    #allocation9 [shape = 's32[1]{0}', space=sflag, size = 0x4, scoped, tag = 'scoped memory for tpu_custom_call.1']
    #allocation10 [shape = 'u8[2048]{0}', space=vmem, size = 0x800, scoped, tag = 'output window, operand 0, single buffered']
    %12 = vsyncpa [#allocation3], 0
    %13 = vsyncpa [#allocation6], 0
    %14 = vsyncpa [#allocation9], 0
    %15 = vsyncpa [#allocation4], 0
    // Predicated region
    $region2: #{tpu_custom_call.1} parent=1 // pred_check
      _
    $region3: #{tpu_custom_call.1} parent=1 // pred_check_branch
      %17 = sbr.rel (0) target = $region5
    $region4: #{tpu_custom_call.1} parent=1 // pred_region
      %s19 = ssub.s32 896, 224
      %20 = vsyncadd [#allocation3], %s19
      %s21 = sshll.u32 [#allocation2], 4
      %s22 = int_to_ptr.vmem [resolvable:$true] %s21
      %27 = dma.hbm_to_vmem [thread:$0]  %s0, 224, %s22, [#allocation3], 224, 224, 14
    $region5: #{tpu_custom_call.1} parent=1 // pred_fallthru
      _
    // Predicated region
    $region6: #{tpu_custom_call.1} parent=1 // pred_check
      _
    $region7: #{tpu_custom_call.1} parent=1 // pred_check_branch
      %29 = sbr.rel (0) target = $region9
    $region8: #{tpu_custom_call.1} parent=1 // pred_region
      %s31 = ssub.s32 6272, 6272
      %32 = vsyncadd [#allocation6], %s31
      %s33 = sshll.u32 [#allocation5], 4
      %s34 = int_to_ptr.vmem [resolvable:$true] %s33
      %39 = dma.hbm_to_vmem [thread:$0]  %s1, 6272, %s34, [#allocation6], 64, 64, 4
    $region9: #{tpu_custom_call.1} parent=1 // pred_fallthru
      _
    // Predicated region
    $region10: #{tpu_custom_call.1} parent=1 // pred_check
      _
    $region11: #{tpu_custom_call.1} parent=1 // pred_check_branch
      %41 = sbr.rel (0) target = $region13
    $region12: #{tpu_custom_call.1} parent=1 // pred_region
      _
    $region13: #{tpu_custom_call.1} parent=1 // pred_fallthru
      _
    // Predicated region
    $region14: #{tpu_custom_call.1} parent=1 // pred_check
      _
    $region15: #{tpu_custom_call.1} parent=1 // pred_check_branch
      %43 = sbr.rel (0) target = $region17
    $region16: #{tpu_custom_call.1} parent=1 // pred_region
      %s45 = ssub.s32 1024, 1024
      %46 = vsyncadd [#allocation6], %s45
      %s47 = sshll.u32 [#allocation7], 4
      %s48 = int_to_ptr.vmem [resolvable:$true] %s47
      %53 = dma.hbm_to_vmem [thread:$0]  %s3, 1024, %s48, [#allocation6], 64, 64, 4
    $region17: #{tpu_custom_call.1} parent=1 // pred_fallthru
      _
    // Predicated region
    $region18: #{tpu_custom_call.1} parent=1 // pred_check
      _
    $region19: #{tpu_custom_call.1} parent=1 // pred_check_branch
      %55 = sbr.rel (0) target = $region21
    $region20: #{tpu_custom_call.1} parent=1 // pred_region
      _
    $region21: #{tpu_custom_call.1} parent=1 // pred_fallthru
      _
    // Predicated region
    $region22: #{tpu_custom_call.1} parent=1 // pred_check
      _
    $region23: #{tpu_custom_call.1} parent=1 // pred_check_branch
      %57 = sbr.rel (0) target = $region25
    $region24: #{tpu_custom_call.1} parent=1 // pred_region
      %s59 = ssub.s32 1024, 1024
      %60 = vsyncadd [#allocation9], %s59
      %s61 = sshll.u32 [#allocation8], 4
      %s62 = int_to_ptr.vmem [resolvable:$true] %s61
      %67 = dma.hbm_to_vmem [thread:$0]  %s5, 1024, %s62, [#allocation9], 64, 64, 4
    $region25: #{tpu_custom_call.1} parent=1 // pred_fallthru
      _
    // Predicated region
    $region26: #{tpu_custom_call.1} parent=1 // pred_check
      _
    $region27: #{tpu_custom_call.1} parent=1 // pred_check_branch
      %69 = sbr.rel (0) target = $region29
    $region28: #{tpu_custom_call.1} parent=1 // pred_region
      _
    $region29: #{tpu_custom_call.1} parent=1 // pred_fallthru
      _
    // Predicated region
    $region30: #{tpu_custom_call.1} parent=1 // pred_check
      _
    $region31: #{tpu_custom_call.1} parent=1 // pred_check_branch
      %71 = sbr.rel (0) target = $region33
    $region32: #{tpu_custom_call.1} parent=1 // pred_region
      %72 = dma.done [#allocation3], 896
    $region33: #{tpu_custom_call.1} parent=1 // pred_fallthru
      _
    // Predicated region
    $region34: #{tpu_custom_call.1} parent=1 // pred_check
      _
    $region35: #{tpu_custom_call.1} parent=1 // pred_check_branch
      %74 = sbr.rel (0) target = $region37
    $region36: #{tpu_custom_call.1} parent=1 // pred_region
      %75 = dma.done [#allocation6], 6272
    $region37: #{tpu_custom_call.1} parent=1 // pred_fallthru
      _
    // Predicated region
    $region38: #{tpu_custom_call.1} parent=1 // pred_check
      _
    $region39: #{tpu_custom_call.1} parent=1 // pred_check_branch
      %77 = sbr.rel (0) target = $region41
    $region40: #{tpu_custom_call.1} parent=1 // pred_region
      %78 = dma.done [#allocation6], 1024
    $region41: #{tpu_custom_call.1} parent=1 // pred_fallthru
      _
    // Predicated region
    $region42: #{tpu_custom_call.1} parent=1 // pred_check
      _
    $region43: #{tpu_custom_call.1} parent=1 // pred_check_branch
      %80 = sbr.rel (0) target = $region45
    $region44: #{tpu_custom_call.1} parent=1 // pred_region
      %81 = dma.done [#allocation9], 1024
    $region45: #{tpu_custom_call.1} parent=1 // pred_fallthru
      _
    %v83 = vld [vmem:[#allocation2] sm:$0xff]
    %v84 = vld [vmem:[#allocation2 + $0x8] sm:$0x3f]
    %v85 = vld [vmem:[#allocation2 + $0xe] sm:$0xff]
    %v86 = vld [vmem:[#allocation2 + $0x16] sm:$0x3f]
    %v87 = vld [vmem:[#allocation2 + $0x1c] sm:$0xff]
    %v88 = vld [vmem:[#allocation2 + $0x24] sm:$0x3f]
    %v89 = vld [vmem:[#allocation2 + $0x2a] sm:$0xff]
    %v90 = vld [vmem:[#allocation2 + $0x32] sm:$0x3f]
    %v99 = vcombine.low %v83, %v85
    %v100 = vcombine.high %v83, %v85
    %v101 = vcombine.low %v87, %v89
    %v102 = vcombine.high %v87, %v89
    %v104 = vunpack.c.l.s4 1983009808
    %v105 = vunpack.c.0.s8 %v104
    %v106 = vlaneseq
    %v107 = vshrl.u32 %v106, 7
    %v108 = vsub.s32 %v105, %v107
    %v109 = vrot.slane %v99, %v108
    %v111 = vunpack.c.l.s4 1983009808
    %v112 = vunpack.c.0.s8 %v111
    %v113 = vlaneseq
    %v114 = vshrl.u32 %v113, 7
    %v115 = vsub.s32 %v112, %v114
    %v116 = vrot.slane %v100, %v115
    %v118 = vunpack.c.l.s4 1983009808
    %v119 = vunpack.c.0.s8 %v118
    %v120 = vlaneseq
    %v121 = vshrl.u32 %v120, 7
    %v122 = vsub.s32 %v119, %v121
    %v123 = vrot.slane %v101, %v122
    %v125 = vunpack.c.l.s4 1983009808
    %v126 = vunpack.c.0.s8 %v125
    %v127 = vlaneseq
    %v128 = vshrl.u32 %v127, 7
    %v129 = vsub.s32 %v126, %v128
    %v130 = vrot.slane %v102, %v129
    %v131 = vcombine.low %v109, %v123
    %v132 = vcombine.high %v109, %v123
    %v133 = vcombine.low %v116, %v130
    %v134 = vcombine.high %v116, %v130
    %v135 = vcombine.low %v84, %v86
    %v136 = vcombine.high %v84, %v86
    %v137 = vcombine.low %v88, %v90
    %v138 = vcombine.high %v88, %v90
    %v140 = vunpack.c.l.s4 1983009808
    %v141 = vunpack.c.0.s8 %v140
    %v142 = vlaneseq
    %v143 = vshrl.u32 %v142, 7
    %v144 = vsub.s32 %v141, %v143
    %v145 = vrot.slane %v135, %v144
    %v147 = vunpack.c.l.s4 1983009808
    %v148 = vunpack.c.0.s8 %v147
    %v149 = vlaneseq
    %v150 = vshrl.u32 %v149, 7
    %v151 = vsub.s32 %v148, %v150
    %v152 = vrot.slane %v136, %v151
    %v154 = vunpack.c.l.s4 1983009808
    %v155 = vunpack.c.0.s8 %v154
    %v156 = vlaneseq
    %v157 = vshrl.u32 %v156, 7
    %v158 = vsub.s32 %v155, %v157
    %v159 = vrot.slane %v137, %v158
    %v161 = vunpack.c.l.s4 1983009808
    %v162 = vunpack.c.0.s8 %v161
    %v163 = vlaneseq
    %v164 = vshrl.u32 %v163, 7
    %v165 = vsub.s32 %v162, %v164
    %v166 = vrot.slane %v138, %v165
    %v167 = vcombine.low %v145, %v159
    %v168 = vcombine.high %v145, %v159
    %v169 = vcombine.low %v152, %v166
    %v177 = vpack.c.bf16 %v131, %v131
    %v178 = vpack.c.bf16 %v132, %v132
    %v179 = vpack.c.bf16 %v133, %v133
    %v180 = vpack.c.bf16 %v134, %v134
    %v181 = vpack.c.bf16 %v167, %v167
    %v182 = vpack.c.bf16 %v168, %v168
    %v183 = vpack.c.bf16 %v169, %v169
    %v184 = vld [vmem:[#allocation5] sm:$0xf]
    %v185 = vld [vmem:[#allocation5 + $0x4] sm:$0xf]
    %v186 = vld [vmem:[#allocation5 + $0x8] sm:$0xf]
    %v187 = vld [vmem:[#allocation5 + $0xc] sm:$0xf]
    %v188 = vld [vmem:[#allocation5 + $0x10] sm:$0xf]
    %v189 = vld [vmem:[#allocation5 + $0x14] sm:$0xf]
    %v190 = vld [vmem:[#allocation5 + $0x18] sm:$0xf]
    %v191 = vld [vmem:[#allocation5 + $0x1c] sm:$0xf]
    %v192 = vld [vmem:[#allocation5 + $0x20] sm:$0xf]
    %v193 = vld [vmem:[#allocation5 + $0x24] sm:$0xf]
    %v194 = vld [vmem:[#allocation5 + $0x28] sm:$0xf]
    %v195 = vld [vmem:[#allocation5 + $0x2c] sm:$0xf]
    %v196 = vld [vmem:[#allocation5 + $0x30] sm:$0xf]
    %v197 = vld [vmem:[#allocation5 + $0x34] sm:$0xf]
    %v198 = vld [vmem:[#allocation5 + $0x38] sm:$0xf]
    %v199 = vld [vmem:[#allocation5 + $0x3c] sm:$0xf]
    %v200 = vld [vmem:[#allocation5 + $0x40] sm:$0xf]
    %v201 = vld [vmem:[#allocation5 + $0x44] sm:$0xf]
    %v202 = vld [vmem:[#allocation5 + $0x48] sm:$0xf]
    %v203 = vld [vmem:[#allocation5 + $0x4c] sm:$0xf]
    %v204 = vld [vmem:[#allocation5 + $0x50] sm:$0xf]
    %v205 = vld [vmem:[#allocation5 + $0x54] sm:$0xf]
    %v206 = vld [vmem:[#allocation5 + $0x58] sm:$0xf]
    %v207 = vld [vmem:[#allocation5 + $0x5c] sm:$0xf]
    %v208 = vld [vmem:[#allocation5 + $0x60] sm:$0xf]
    %v209 = vld [vmem:[#allocation5 + $0x64] sm:$0xf]
    %v210 = vld [vmem:[#allocation5 + $0x68] sm:$0xf]
    %v211 = vld [vmem:[#allocation5 + $0x6c] sm:$0xf]
    %v212 = vld [vmem:[#allocation5 + $0x70] sm:$0xf]
    %v213 = vld [vmem:[#allocation5 + $0x74] sm:$0xf]
    %v214 = vld [vmem:[#allocation5 + $0x78] sm:$0xf]
    %v215 = vld [vmem:[#allocation5 + $0x7c] sm:$0xf]
    %v216 = vld [vmem:[#allocation5 + $0x80] sm:$0xf]
    %v217 = vld [vmem:[#allocation5 + $0x84] sm:$0xf]
    %v218 = vld [vmem:[#allocation5 + $0x88] sm:$0xf]
    %v219 = vld [vmem:[#allocation5 + $0x8c] sm:$0xf]
    %v220 = vld [vmem:[#allocation5 + $0x90] sm:$0xf]
    %v221 = vld [vmem:[#allocation5 + $0x94] sm:$0xf]
    %v222 = vld [vmem:[#allocation5 + $0x98] sm:$0xf]
    %v223 = vld [vmem:[#allocation5 + $0x9c] sm:$0xf]
    %v224 = vld [vmem:[#allocation5 + $0xa0] sm:$0xf]
    %v225 = vld [vmem:[#allocation5 + $0xa4] sm:$0xf]
    %v226 = vld [vmem:[#allocation5 + $0xa8] sm:$0xf]
    %v227 = vld [vmem:[#allocation5 + $0xac] sm:$0xf]
    %v228 = vld [vmem:[#allocation5 + $0xb0] sm:$0xf]
    %v229 = vld [vmem:[#allocation5 + $0xb4] sm:$0xf]
    %v230 = vld [vmem:[#allocation5 + $0xb8] sm:$0xf]
    %v231 = vld [vmem:[#allocation5 + $0xbc] sm:$0xf]
    %v232 = vld [vmem:[#allocation5 + $0xc0] sm:$0xf]
    %v233 = vld [vmem:[#allocation5 + $0xc4] sm:$0xf]
    %v234 = vld [vmem:[#allocation5 + $0xc8] sm:$0xf]
    %v235 = vld [vmem:[#allocation5 + $0xcc] sm:$0xf]
    %v236 = vld [vmem:[#allocation5 + $0xd0] sm:$0xf]
    %v237 = vld [vmem:[#allocation5 + $0xd4] sm:$0xf]
    %v238 = vld [vmem:[#allocation5 + $0xd8] sm:$0xf]
    %v239 = vld [vmem:[#allocation5 + $0xdc] sm:$0xf]
    %v240 = vld [vmem:[#allocation5 + $0xe0] sm:$0xf]
    %v241 = vld [vmem:[#allocation5 + $0xe4] sm:$0xf]
    %v242 = vld [vmem:[#allocation5 + $0xe8] sm:$0xf]
    %v243 = vld [vmem:[#allocation5 + $0xec] sm:$0xf]
    %v244 = vld [vmem:[#allocation5 + $0xf0] sm:$0xf]
    %v245 = vld [vmem:[#allocation5 + $0xf4] sm:$0xf]
    %v246 = vld [vmem:[#allocation5 + $0xf8] sm:$0xf]
    %v247 = vld [vmem:[#allocation5 + $0xfc] sm:$0xf]
    %v248 = vld [vmem:[#allocation5 + $0x100] sm:$0xf]
    %v249 = vld [vmem:[#allocation5 + $0x104] sm:$0xf]
    %v250 = vld [vmem:[#allocation5 + $0x108] sm:$0xf]
    %v251 = vld [vmem:[#allocation5 + $0x10c] sm:$0xf]
    %v252 = vld [vmem:[#allocation5 + $0x110] sm:$0xf]
    %v253 = vld [vmem:[#allocation5 + $0x114] sm:$0xf]
    %v254 = vld [vmem:[#allocation5 + $0x118] sm:$0xf]
    %v255 = vld [vmem:[#allocation5 + $0x11c] sm:$0xf]
    %v256 = vld [vmem:[#allocation5 + $0x120] sm:$0xf]
    %v257 = vld [vmem:[#allocation5 + $0x124] sm:$0xf]
    %v258 = vld [vmem:[#allocation5 + $0x128] sm:$0xf]
    %v259 = vld [vmem:[#allocation5 + $0x12c] sm:$0xf]
    %v260 = vld [vmem:[#allocation5 + $0x130] sm:$0xf]
    %v261 = vld [vmem:[#allocation5 + $0x134] sm:$0xf]
    %v262 = vld [vmem:[#allocation5 + $0x138] sm:$0xf]
    %v263 = vld [vmem:[#allocation5 + $0x13c] sm:$0xf]
    %v264 = vld [vmem:[#allocation5 + $0x140] sm:$0xf]
    %v265 = vld [vmem:[#allocation5 + $0x144] sm:$0xf]
    %v266 = vld [vmem:[#allocation5 + $0x148] sm:$0xf]
    %v267 = vld [vmem:[#allocation5 + $0x14c] sm:$0xf]
    %v268 = vld [vmem:[#allocation5 + $0x150] sm:$0xf]
    %v269 = vld [vmem:[#allocation5 + $0x154] sm:$0xf]
    %v270 = vld [vmem:[#allocation5 + $0x158] sm:$0xf]
    %v271 = vld [vmem:[#allocation5 + $0x15c] sm:$0xf]
    %v272 = vld [vmem:[#allocation5 + $0x160] sm:$0xf]
    %v273 = vld [vmem:[#allocation5 + $0x164] sm:$0xf]
    %v274 = vld [vmem:[#allocation5 + $0x168] sm:$0xf]
    %v275 = vld [vmem:[#allocation5 + $0x16c] sm:$0xf]
    %v276 = vld [vmem:[#allocation5 + $0x170] sm:$0xf]
    %v277 = vld [vmem:[#allocation5 + $0x174] sm:$0xf]
    %v278 = vld [vmem:[#allocation5 + $0x178] sm:$0xf]
    %v279 = vld [vmem:[#allocation5 + $0x17c] sm:$0xf]
    %v280 = vld [vmem:[#allocation5 + $0x180] sm:$0xf]
    %v281 = vld [vmem:[#allocation5 + $0x184] sm:$0xf]
    %v282 = vld [vmem:[%s2] sm:$0x1]
    %v284 = vlaneseq
    %v285 = vshrl.u32 %v284, 7
    %v286 = vsub.s32 0, %v285
    %v287 = vrot.slane %v282, %v286
    %v387 = vunpack.c.l.b16 %v184
    %v388 = vunpack.c.l.b16 %v185
    %v389 = vunpack.c.l.b16 %v186
    %v390 = vunpack.c.l.b16 %v187
    %v391 = vunpack.c.l.b16 %v188
    %v392 = vunpack.c.l.b16 %v189
    %v393 = vunpack.c.l.b16 %v190
    %v394 = vunpack.c.l.b16 %v191
    %v395 = vunpack.c.l.b16 %v192
    %v396 = vunpack.c.l.b16 %v193
    %v397 = vunpack.c.l.b16 %v194
    %v398 = vunpack.c.l.b16 %v195
    %v399 = vunpack.c.l.b16 %v196
    %v400 = vunpack.c.l.b16 %v197
    %v401 = vunpack.c.l.b16 %v198
    %v402 = vunpack.c.l.b16 %v199
    %v403 = vunpack.c.l.b16 %v200
    %v404 = vunpack.c.l.b16 %v201
    %v405 = vunpack.c.l.b16 %v202
    %v406 = vunpack.c.l.b16 %v203
    %v407 = vunpack.c.l.b16 %v204
    %v408 = vunpack.c.l.b16 %v205
    %v409 = vunpack.c.l.b16 %v206
    %v410 = vunpack.c.l.b16 %v207
    %v411 = vunpack.c.l.b16 %v208
    %v412 = vunpack.c.l.b16 %v209
    %v413 = vunpack.c.l.b16 %v210
    %v414 = vunpack.c.l.b16 %v211
    %v415 = vunpack.c.l.b16 %v212
    %v416 = vunpack.c.l.b16 %v213
    %v417 = vunpack.c.l.b16 %v214
    %v418 = vunpack.c.l.b16 %v215
    %v419 = vunpack.c.l.b16 %v216
    %v420 = vunpack.c.l.b16 %v217
    %v421 = vunpack.c.l.b16 %v218
    %v422 = vunpack.c.l.b16 %v219
    %v423 = vunpack.c.l.b16 %v220
    %v424 = vunpack.c.l.b16 %v221
    %v425 = vunpack.c.l.b16 %v222
    %v426 = vunpack.c.l.b16 %v223
    %v427 = vunpack.c.l.b16 %v224
    %v428 = vunpack.c.l.b16 %v225
    %v429 = vunpack.c.l.b16 %v226
    %v430 = vunpack.c.l.b16 %v227
    %v431 = vunpack.c.l.b16 %v228
    %v432 = vunpack.c.l.b16 %v229
    %v433 = vunpack.c.l.b16 %v230
    %v434 = vunpack.c.l.b16 %v231
    %v435 = vunpack.c.l.b16 %v232
    %v436 = vunpack.c.l.b16 %v233
    %v437 = vunpack.c.l.b16 %v234
    %v438 = vunpack.c.l.b16 %v235
    %v439 = vunpack.c.l.b16 %v236
    %v440 = vunpack.c.l.b16 %v237
    %v441 = vunpack.c.l.b16 %v238
    %v442 = vunpack.c.l.b16 %v239
    %v443 = vunpack.c.l.b16 %v240
    %v444 = vunpack.c.l.b16 %v241
    %v445 = vunpack.c.l.b16 %v242
    %v446 = vunpack.c.l.b16 %v243
    %v447 = vunpack.c.l.b16 %v244
    %v448 = vunpack.c.l.b16 %v245
    %v449 = vunpack.c.l.b16 %v246
    %v450 = vunpack.c.l.b16 %v247
    %v451 = vunpack.c.l.b16 %v248
    %v452 = vunpack.c.l.b16 %v249
    %v453 = vunpack.c.l.b16 %v250
    %v454 = vunpack.c.l.b16 %v251
    %v455 = vunpack.c.l.b16 %v252
    %v456 = vunpack.c.l.b16 %v253
    %v457 = vunpack.c.l.b16 %v254
    %v458 = vunpack.c.l.b16 %v255
    %v459 = vunpack.c.l.b16 %v256
    %v460 = vunpack.c.l.b16 %v257
    %v461 = vunpack.c.l.b16 %v258
    %v462 = vunpack.c.l.b16 %v259
    %v463 = vunpack.c.l.b16 %v260
    %v464 = vunpack.c.l.b16 %v261
    %v465 = vunpack.c.l.b16 %v262
    %v466 = vunpack.c.l.b16 %v263
    %v467 = vunpack.c.l.b16 %v264
    %v468 = vunpack.c.l.b16 %v265
    %v469 = vunpack.c.l.b16 %v266
    %v470 = vunpack.c.l.b16 %v267
    %v471 = vunpack.c.l.b16 %v268
    %v472 = vunpack.c.l.b16 %v269
    %v473 = vunpack.c.l.b16 %v270
    %v474 = vunpack.c.l.b16 %v271
    %v475 = vunpack.c.l.b16 %v272
    %v476 = vunpack.c.l.b16 %v273
    %v477 = vunpack.c.l.b16 %v274
    %v478 = vunpack.c.l.b16 %v275
    %v479 = vunpack.c.l.b16 %v276
    %v480 = vunpack.c.l.b16 %v277
    %v481 = vunpack.c.l.b16 %v278
    %v482 = vunpack.c.l.b16 %v279
    %v483 = vunpack.c.l.b16 %v280
    %v484 = vunpack.c.l.b16 %v281
    %v485 = vpack.c.b16 %v388, %v387
    %v486 = vpack.c.b16 %v390, %v389
    %v487 = vpack.c.b16 %v392, %v391
    %v488 = vpack.c.b16 %v394, %v393
    %v489 = vpack.c.b16 %v396, %v395
    %v490 = vpack.c.b16 %v398, %v397
    %v491 = vpack.c.b16 %v400, %v399
    %v492 = vpack.c.b16 %v402, %v401
    %v493 = vpack.c.b16 %v404, %v403
    %v494 = vpack.c.b16 %v406, %v405
    %v495 = vpack.c.b16 %v408, %v407
    %v496 = vpack.c.b16 %v410, %v409
    %v497 = vpack.c.b16 %v412, %v411
    %v498 = vpack.c.b16 %v414, %v413
    %v499 = vpack.c.b16 %v416, %v415
    %v500 = vpack.c.b16 %v418, %v417
    %v501 = vpack.c.b16 %v420, %v419
    %v502 = vpack.c.b16 %v422, %v421
    %v503 = vpack.c.b16 %v424, %v423
    %v504 = vpack.c.b16 %v426, %v425
    %v505 = vpack.c.b16 %v428, %v427
    %v506 = vpack.c.b16 %v430, %v429
    %v507 = vpack.c.b16 %v432, %v431
    %v508 = vpack.c.b16 %v434, %v433
    %v509 = vpack.c.b16 %v436, %v435
    %v510 = vpack.c.b16 %v438, %v437
    %v511 = vpack.c.b16 %v440, %v439
    %v512 = vpack.c.b16 %v442, %v441
    %v513 = vpack.c.b16 %v444, %v443
    %v514 = vpack.c.b16 %v446, %v445
    %v515 = vpack.c.b16 %v448, %v447
    %v516 = vpack.c.b16 %v450, %v449
    %v517 = vpack.c.b16 %v452, %v451
    %v518 = vpack.c.b16 %v454, %v453
    %v519 = vpack.c.b16 %v456, %v455
    %v520 = vpack.c.b16 %v458, %v457
    %v521 = vpack.c.b16 %v460, %v459
    %v522 = vpack.c.b16 %v462, %v461
    %v523 = vpack.c.b16 %v464, %v463
    %v524 = vpack.c.b16 %v466, %v465
    %v525 = vpack.c.b16 %v468, %v467
    %v526 = vpack.c.b16 %v470, %v469
    %v527 = vpack.c.b16 %v472, %v471
    %v528 = vpack.c.b16 %v474, %v473
    %v529 = vpack.c.b16 %v476, %v475
    %v530 = vpack.c.b16 %v478, %v477
    %v531 = vpack.c.b16 %v480, %v479
    %v532 = vpack.c.b16 %v482, %v481
    %v533 = vpack.c.b16 %v484, %v483
    %vm583 = vcmask 130048
    %v585 = vsel %vm583, %v183, 0
    %587 = vmatprep.subr.bf16.mxu0 0
    %588 = vmatpush1.bf16.msra.mxu0 %v492
    %589 = vmatprep.subr.bf16.mxu0 0
    %590 = vmatpush1.bf16.msra.mxu0 %v491
    %591 = vmatprep.subr.bf16.mxu0 0
    %592 = vmatpush1.bf16.msra.mxu0 %v490
    %593 = vmatprep.subr.bf16.mxu0 0
    %594 = vmatpush1.bf16.msra.mxu0 %v489
    %595 = vmatprep.subr.bf16.mxu0 0
    %596 = vmatpush1.bf16.msra.mxu0 %v488
    %597 = vmatprep.subr.bf16.mxu0 0
    %598 = vmatpush1.bf16.msra.mxu0 %v487
    %599 = vmatprep.subr.bf16.mxu0 0
    %600 = vmatpush1.bf16.msra.mxu0 %v486
    %601 = vmatprep.subr.bf16.mxu0 0
    %602 = vmatpush1.bf16.msra.mxu0 %v485
    %603 = vmatprep.subr.bf16.mxu0 0
    %604 = vmatpush2.bf16.msra.mxu0 %v500
    %605 = vmatprep.subr.bf16.mxu0 0
    %606 = vmatpush2.bf16.msra.mxu0 %v499
    %607 = vmatprep.subr.bf16.mxu0 0
    %608 = vmatpush2.bf16.msra.mxu0 %v498
    %609 = vmatprep.subr.bf16.mxu0 0
    %610 = vmatpush2.bf16.msra.mxu0 %v497
    %611 = vmatprep.subr.bf16.mxu0 0
    %612 = vmatpush2.bf16.msra.mxu0 %v496
    %613 = vmatprep.subr.bf16.mxu0 0
    %614 = vmatpush2.bf16.msra.mxu0 %v495
    %615 = vmatprep.subr.bf16.mxu0 0
    %616 = vmatpush2.bf16.msra.mxu0 %v494
    %617 = vmatprep.subr.bf16.mxu0 0
    %618 = vmatpush2.bf16.msra.mxu0 %v493
    %619 = vmatprep.mubr.bf16.mxu0 %v178
    %620 = vmatmul.mubr.bf16.gmra.mxu0 %v177
    %v621 = vpop.f32.mrf.mxu0
    %v622 = vadd.f32 %v287, %v621
    %v623 = vpop.f32.mrf.mxu0
    %v624 = vpop.f32.mrf.mxu0
    %v625 = vpop.f32.mrf.mxu0
    %626 = vdwg.mxu0
    %627 = vmatprep.subr.bf16.mxu0 0
    %628 = vmatpush1.bf16.msra.mxu0 %v508
    %629 = vmatprep.subr.bf16.mxu0 0
    %630 = vmatpush1.bf16.msra.mxu0 %v507
    %631 = vmatprep.subr.bf16.mxu0 0
    %632 = vmatpush1.bf16.msra.mxu0 %v506
    %633 = vmatprep.subr.bf16.mxu0 0
    %634 = vmatpush1.bf16.msra.mxu0 %v505
    %635 = vmatprep.subr.bf16.mxu0 0
    %636 = vmatpush1.bf16.msra.mxu0 %v504
    %637 = vmatprep.subr.bf16.mxu0 0
    %638 = vmatpush1.bf16.msra.mxu0 %v503
    %639 = vmatprep.subr.bf16.mxu0 0
    %640 = vmatpush1.bf16.msra.mxu0 %v502
    %641 = vmatprep.subr.bf16.mxu0 0
    %642 = vmatpush1.bf16.msra.mxu0 %v501
    %643 = vmatprep.subr.bf16.mxu0 0
    %644 = vmatpush2.bf16.msra.mxu0 %v516
    %645 = vmatprep.subr.bf16.mxu0 0
    %646 = vmatpush2.bf16.msra.mxu0 %v515
    %647 = vmatprep.subr.bf16.mxu0 0
    %648 = vmatpush2.bf16.msra.mxu0 %v514
    %649 = vmatprep.subr.bf16.mxu0 0
    %650 = vmatpush2.bf16.msra.mxu0 %v513
    %651 = vmatprep.subr.bf16.mxu0 0
    %652 = vmatpush2.bf16.msra.mxu0 %v512
    %653 = vmatprep.subr.bf16.mxu0 0
    %654 = vmatpush2.bf16.msra.mxu0 %v511
    %655 = vmatprep.subr.bf16.mxu0 0
    %656 = vmatpush2.bf16.msra.mxu0 %v510
    %657 = vmatprep.subr.bf16.mxu0 0
    %658 = vmatpush2.bf16.msra.mxu0 %v509
    %659 = vmatprep.mubr.bf16.mxu0 %v180
    %660 = vmatmul.mubr.bf16.gmra.mxu0 %v179
    %v661 = vpop.f32.mrf.mxu0
    %v662 = vadd.f32 %v622, %v661
    %v663 = vpop.f32.mrf.mxu0
    %v664 = vpop.f32.mrf.mxu0
    %v665 = vpop.f32.mrf.mxu0
    %666 = vdwg.mxu0
    %667 = vmatprep.subr.bf16.mxu0 0
    %668 = vmatpush1.bf16.msra.mxu0 %v524
    %669 = vmatprep.subr.bf16.mxu0 0
    %670 = vmatpush1.bf16.msra.mxu0 %v523
    %671 = vmatprep.subr.bf16.mxu0 0
    %672 = vmatpush1.bf16.msra.mxu0 %v522
    %673 = vmatprep.subr.bf16.mxu0 0
    %674 = vmatpush1.bf16.msra.mxu0 %v521
    %675 = vmatprep.subr.bf16.mxu0 0
    %676 = vmatpush1.bf16.msra.mxu0 %v520
    %677 = vmatprep.subr.bf16.mxu0 0
    %678 = vmatpush1.bf16.msra.mxu0 %v519
    %679 = vmatprep.subr.bf16.mxu0 0
    %680 = vmatpush1.bf16.msra.mxu0 %v518
    %681 = vmatprep.subr.bf16.mxu0 0
    %682 = vmatpush1.bf16.msra.mxu0 %v517
    %683 = vmatprep.subr.bf16.mxu0 0
    %684 = vmatpush2.bf16.msra.mxu0 %v532
    %685 = vmatprep.subr.bf16.mxu0 0
    %686 = vmatpush2.bf16.msra.mxu0 %v531
    %687 = vmatprep.subr.bf16.mxu0 0
    %688 = vmatpush2.bf16.msra.mxu0 %v530
    %689 = vmatprep.subr.bf16.mxu0 0
    %690 = vmatpush2.bf16.msra.mxu0 %v529
    %691 = vmatprep.subr.bf16.mxu0 0
    %692 = vmatpush2.bf16.msra.mxu0 %v528
    %693 = vmatprep.subr.bf16.mxu0 0
    %694 = vmatpush2.bf16.msra.mxu0 %v527
    %695 = vmatprep.subr.bf16.mxu0 0
    %696 = vmatpush2.bf16.msra.mxu0 %v526
    %697 = vmatprep.subr.bf16.mxu0 0
    %698 = vmatpush2.bf16.msra.mxu0 %v525
    %699 = vmatprep.mubr.bf16.mxu0 %v182
    %700 = vmatmul.mubr.bf16.gmra.mxu0 %v181
    %v701 = vpop.f32.mrf.mxu0
    %v702 = vadd.f32 %v662, %v701
    %v703 = vpop.f32.mrf.mxu0
    %v704 = vpop.f32.mrf.mxu0
    %v705 = vpop.f32.mrf.mxu0
    %706 = vdwg.mxu0
    %707 = vmatprep.subr.bf16.mxu0 0
    %708 = vmatpush1.bf16.msra.mxu0 0
    %709 = vmatprep.subr.bf16.mxu0 0
    %710 = vmatpush1.bf16.msra.mxu0 0
    %711 = vmatprep.subr.bf16.mxu0 0
    %712 = vmatpush1.bf16.msra.mxu0 0
    %713 = vmatprep.subr.bf16.mxu0 0
    %714 = vmatpush1.bf16.msra.mxu0 0
    %715 = vmatprep.subr.bf16.mxu0 0
    %716 = vmatpush1.bf16.msra.mxu0 0
    %717 = vmatprep.subr.bf16.mxu0 0
    %718 = vmatpush1.bf16.msra.mxu0 0
    %719 = vmatprep.subr.bf16.mxu0 0
    %720 = vmatpush1.bf16.msra.mxu0 0
    %721 = vmatprep.subr.bf16.mxu0 0
    %722 = vmatpush1.bf16.msra.mxu0 %v533
    %723 = vmatprep.subr.bf16.mxu0 0
    %724 = vmatpush2.bf16.msra.mxu0 0
    %725 = vmatprep.subr.bf16.mxu0 0
    %726 = vmatpush2.bf16.msra.mxu0 0
    %727 = vmatprep.subr.bf16.mxu0 0
    %728 = vmatpush2.bf16.msra.mxu0 0
    %729 = vmatprep.subr.bf16.mxu0 0
    %730 = vmatpush2.bf16.msra.mxu0 0
    %731 = vmatprep.subr.bf16.mxu0 0
    %732 = vmatpush2.bf16.msra.mxu0 0
    %733 = vmatprep.subr.bf16.mxu0 0
    %734 = vmatpush2.bf16.msra.mxu0 0
    %735 = vmatprep.subr.bf16.mxu0 0
    %736 = vmatpush2.bf16.msra.mxu0 0
    %737 = vmatprep.subr.bf16.mxu0 0
    %738 = vmatpush2.bf16.msra.mxu0 0
    %739 = vmatprep.mubr.bf16.mxu0 0
    %740 = vmatmul.mubr.bf16.gmra.mxu0 %v585
    %v741 = vpop.f32.mrf.mxu0
    %v742 = vadd.f32 %v702, %v741
    %v743 = vpop.f32.mrf.mxu0
    %v744 = vpop.f32.mrf.mxu0
    %v745 = vpop.f32.mrf.mxu0
    %746 = vdwg.mxu0
    %v747 = vxor.u32 %v742, 2147483648
    %v748 = vmul.f32 %v747, 1.442695
    %v749 = vpow.pop %v748
    %v750 = vadd.f32 %v749, 1.0
    %v751 = vrcp.pop %v750
    %v752 = vmul.f32 1.0, %v751
    %v753 = vpack.c.bf16 %v752, %v752
    %v754 = vld [vmem:[#allocation7] sm:$0xf]
    %v755 = vld [vmem:[#allocation7 + $0x4] sm:$0xf]
    %v756 = vld [vmem:[#allocation7 + $0x8] sm:$0xf]
    %v757 = vld [vmem:[#allocation7 + $0xc] sm:$0xf]
    %v758 = vld [vmem:[#allocation7 + $0x10] sm:$0xf]
    %v759 = vld [vmem:[#allocation7 + $0x14] sm:$0xf]
    %v760 = vld [vmem:[#allocation7 + $0x18] sm:$0xf]
    %v761 = vld [vmem:[#allocation7 + $0x1c] sm:$0xf]
    %v762 = vld [vmem:[#allocation7 + $0x20] sm:$0xf]
    %v763 = vld [vmem:[#allocation7 + $0x24] sm:$0xf]
    %v764 = vld [vmem:[#allocation7 + $0x28] sm:$0xf]
    %v765 = vld [vmem:[#allocation7 + $0x2c] sm:$0xf]
    %v766 = vld [vmem:[#allocation7 + $0x30] sm:$0xf]
    %v767 = vld [vmem:[#allocation7 + $0x34] sm:$0xf]
    %v768 = vld [vmem:[#allocation7 + $0x38] sm:$0xf]
    %v769 = vld [vmem:[#allocation7 + $0x3c] sm:$0xf]
    %v770 = vld [vmem:[%s4] sm:$0x1]
    %v772 = vlaneseq
    %v773 = vshrl.u32 %v772, 7
    %v774 = vsub.s32 0, %v773
    %v775 = vrot.slane %v770, %v774
    %v793 = vunpack.c.l.b16 %v754
    %v794 = vunpack.c.l.b16 %v755
    %v795 = vunpack.c.l.b16 %v756
    %v796 = vunpack.c.l.b16 %v757
    %v797 = vunpack.c.l.b16 %v758
    %v798 = vunpack.c.l.b16 %v759
    %v799 = vunpack.c.l.b16 %v760
    %v800 = vunpack.c.l.b16 %v761
    %v801 = vunpack.c.l.b16 %v762
    %v802 = vunpack.c.l.b16 %v763
    %v803 = vunpack.c.l.b16 %v764
    %v804 = vunpack.c.l.b16 %v765
    %v805 = vunpack.c.l.b16 %v766
    %v806 = vunpack.c.l.b16 %v767
    %v807 = vunpack.c.l.b16 %v768
    %v808 = vunpack.c.l.b16 %v769
    %v809 = vpack.c.b16 %v794, %v793
    %v810 = vpack.c.b16 %v796, %v795
    %v811 = vpack.c.b16 %v798, %v797
    %v812 = vpack.c.b16 %v800, %v799
    %v813 = vpack.c.b16 %v802, %v801
    %v814 = vpack.c.b16 %v804, %v803
    %v815 = vpack.c.b16 %v806, %v805
    %v816 = vpack.c.b16 %v808, %v807
    %825 = vmatprep.subr.bf16.mxu0 0
    %826 = vmatpush1.bf16.msra.mxu0 %v816
    %827 = vmatprep.subr.bf16.mxu0 0
    %828 = vmatpush1.bf16.msra.mxu0 %v815
    %829 = vmatprep.subr.bf16.mxu0 0
    %830 = vmatpush1.bf16.msra.mxu0 %v814
    %831 = vmatprep.subr.bf16.mxu0 0
    %832 = vmatpush1.bf16.msra.mxu0 %v813
    %833 = vmatprep.subr.bf16.mxu0 0
    %834 = vmatpush1.bf16.msra.mxu0 %v812
    %835 = vmatprep.subr.bf16.mxu0 0
    %836 = vmatpush1.bf16.msra.mxu0 %v811
    %837 = vmatprep.subr.bf16.mxu0 0
    %838 = vmatpush1.bf16.msra.mxu0 %v810
    %839 = vmatprep.subr.bf16.mxu0 0
    %840 = vmatpush1.bf16.msra.mxu0 %v809
    %841 = vmatprep.subr.bf16.mxu0 0
    %842 = vmatpush2.bf16.msra.mxu0 0
    %843 = vmatprep.subr.bf16.mxu0 0
    %844 = vmatpush2.bf16.msra.mxu0 0
    %845 = vmatprep.subr.bf16.mxu0 0
    %846 = vmatpush2.bf16.msra.mxu0 0
    %847 = vmatprep.subr.bf16.mxu0 0
    %848 = vmatpush2.bf16.msra.mxu0 0
    %849 = vmatprep.subr.bf16.mxu0 0
    %850 = vmatpush2.bf16.msra.mxu0 0
    %851 = vmatprep.subr.bf16.mxu0 0
    %852 = vmatpush2.bf16.msra.mxu0 0
    %853 = vmatprep.subr.bf16.mxu0 0
    %854 = vmatpush2.bf16.msra.mxu0 0
    %855 = vmatprep.subr.bf16.mxu0 0
    %856 = vmatpush2.bf16.msra.mxu0 0
    %857 = vmatprep.mubr.bf16.mxu0 0
    %858 = vmatmul.mubr.bf16.gmra.mxu0 %v753
    %v859 = vpop.f32.mrf.mxu0
    %v860 = vadd.f32 %v775, %v859
    %v861 = vpop.f32.mrf.mxu0
    %v862 = vpop.f32.mrf.mxu0
    %v863 = vpop.f32.mrf.mxu0
    %864 = vdwg.mxu0
    %v865 = vxor.u32 %v860, 2147483648
    %v866 = vmul.f32 %v865, 1.442695
    %v867 = vpow.pop %v866
    %v868 = vadd.f32 %v867, 1.0
    %v869 = vrcp.pop %v868
    %v870 = vmul.f32 1.0, %v869
    %v871 = vpack.c.bf16 %v870, %v870
    %v872 = vld [vmem:[#allocation8] sm:$0xf]
    %v873 = vld [vmem:[#allocation8 + $0x4] sm:$0xf]
    %v874 = vld [vmem:[#allocation8 + $0x8] sm:$0xf]
    %v875 = vld [vmem:[#allocation8 + $0xc] sm:$0xf]
    %v876 = vld [vmem:[#allocation8 + $0x10] sm:$0xf]
    %v877 = vld [vmem:[#allocation8 + $0x14] sm:$0xf]
    %v878 = vld [vmem:[#allocation8 + $0x18] sm:$0xf]
    %v879 = vld [vmem:[#allocation8 + $0x1c] sm:$0xf]
    %v880 = vld [vmem:[#allocation8 + $0x20] sm:$0xf]
    %v881 = vld [vmem:[#allocation8 + $0x24] sm:$0xf]
    %v882 = vld [vmem:[#allocation8 + $0x28] sm:$0xf]
    %v883 = vld [vmem:[#allocation8 + $0x2c] sm:$0xf]
    %v884 = vld [vmem:[#allocation8 + $0x30] sm:$0xf]
    %v885 = vld [vmem:[#allocation8 + $0x34] sm:$0xf]
    %v886 = vld [vmem:[#allocation8 + $0x38] sm:$0xf]
    %v887 = vld [vmem:[#allocation8 + $0x3c] sm:$0xf]
    %v888 = vld [vmem:[%s6] sm:$0x1]
    %v890 = vlaneseq
    %v891 = vshrl.u32 %v890, 7
    %v892 = vsub.s32 0, %v891
    %v893 = vrot.slane %v888, %v892
    %v911 = vunpack.c.l.b16 %v872
    %v912 = vunpack.c.l.b16 %v873
    %v913 = vunpack.c.l.b16 %v874
    %v914 = vunpack.c.l.b16 %v875
    %v915 = vunpack.c.l.b16 %v876
    %v916 = vunpack.c.l.b16 %v877
    %v917 = vunpack.c.l.b16 %v878
    %v918 = vunpack.c.l.b16 %v879
    %v919 = vunpack.c.l.b16 %v880
    %v920 = vunpack.c.l.b16 %v881
    %v921 = vunpack.c.l.b16 %v882
    %v922 = vunpack.c.l.b16 %v883
    %v923 = vunpack.c.l.b16 %v884
    %v924 = vunpack.c.l.b16 %v885
    %v925 = vunpack.c.l.b16 %v886
    %v926 = vunpack.c.l.b16 %v887
    %v927 = vpack.c.b16 %v912, %v911
    %v928 = vpack.c.b16 %v914, %v913
    %v929 = vpack.c.b16 %v916, %v915
    %v930 = vpack.c.b16 %v918, %v917
    %v931 = vpack.c.b16 %v920, %v919
    %v932 = vpack.c.b16 %v922, %v921
    %v933 = vpack.c.b16 %v924, %v923
    %v934 = vpack.c.b16 %v926, %v925
    %943 = vmatprep.subr.bf16.mxu0 0
    %944 = vmatpush1.bf16.msra.mxu0 %v934
    %945 = vmatprep.subr.bf16.mxu0 0
    %946 = vmatpush1.bf16.msra.mxu0 %v933
    %947 = vmatprep.subr.bf16.mxu0 0
    %948 = vmatpush1.bf16.msra.mxu0 %v932
    %949 = vmatprep.subr.bf16.mxu0 0
    %950 = vmatpush1.bf16.msra.mxu0 %v931
    %951 = vmatprep.subr.bf16.mxu0 0
    %952 = vmatpush1.bf16.msra.mxu0 %v930
    %953 = vmatprep.subr.bf16.mxu0 0
    %954 = vmatpush1.bf16.msra.mxu0 %v929
    %955 = vmatprep.subr.bf16.mxu0 0
    %956 = vmatpush1.bf16.msra.mxu0 %v928
    %957 = vmatprep.subr.bf16.mxu0 0
    %958 = vmatpush1.bf16.msra.mxu0 %v927
    %959 = vmatprep.subr.bf16.mxu0 0
    %960 = vmatpush2.bf16.msra.mxu0 0
    %961 = vmatprep.subr.bf16.mxu0 0
    %962 = vmatpush2.bf16.msra.mxu0 0
    %963 = vmatprep.subr.bf16.mxu0 0
    %964 = vmatpush2.bf16.msra.mxu0 0
    %965 = vmatprep.subr.bf16.mxu0 0
    %966 = vmatpush2.bf16.msra.mxu0 0
    %967 = vmatprep.subr.bf16.mxu0 0
    %968 = vmatpush2.bf16.msra.mxu0 0
    %969 = vmatprep.subr.bf16.mxu0 0
    %970 = vmatpush2.bf16.msra.mxu0 0
    %971 = vmatprep.subr.bf16.mxu0 0
    %972 = vmatpush2.bf16.msra.mxu0 0
    %973 = vmatprep.subr.bf16.mxu0 0
    %974 = vmatpush2.bf16.msra.mxu0 0
    %975 = vmatprep.mubr.bf16.mxu0 0
    %976 = vmatmul.mubr.bf16.gmra.mxu0 %v871
    %v977 = vpop.f32.mrf.mxu0
    %v978 = vadd.f32 %v893, %v977
    %v979 = vpop.f32.mrf.mxu0
    %v980 = vpop.f32.mrf.mxu0
    %v981 = vpop.f32.mrf.mxu0
    %982 = vdwg.mxu0
    %983 = vmax.xlane.f32.xlu0 %v978
    %v984 = vpop.xlane.xlu0 %983
    %v985 = vsub.f32 %v978, %v984
    %v986 = vmul.f32 %v985, 1.442695
    %v987 = vpow.pop %v986
    %988 = vadd.xlane.f32.xlu0 %v987
    %v989 = vpop.xlane.xlu0 %988
    %v990 = vlog2.pop %v989
    %v991 = vmul.f32 %v990, 0.6931472
    %v992 = vsub.f32 %v985, %v991
    %v993 = vpack.c.bf16 %v992, %v992
    %994 = vst [vmem:[#allocation10] sm:$0xf] %v993
    // Predicated region
    $region46: #{tpu_custom_call.1} parent=1 // pred_check
      _
    $region47: #{tpu_custom_call.1} parent=1 // pred_check_branch
      %996 = sbr.rel (0) target = $region49
    $region48: #{tpu_custom_call.1} parent=1 // pred_region
      %s998 = ssub.s32 64, 64
      %999 = vsyncadd [#allocation4], %s998
      %s1001 = sshll.u32 [#allocation10], 4
      %s1002 = int_to_ptr.vmem [resolvable:$true] %s1001
      %1004 = dma.vmem_to_hbm [thread:$0]  %s1002, 64, %s7, [#allocation4]
    $region49: #{tpu_custom_call.1} parent=1 // pred_fallthru
      _
    // Predicated region
    $region50: #{tpu_custom_call.1} parent=1 // pred_check
      _
    $region51: #{tpu_custom_call.1} parent=1 // pred_check_branch
      %1006 = sbr.rel (0) target = $region53
    $region52: #{tpu_custom_call.1} parent=1 // pred_region
      %1007 = dma.done [#allocation4], 64
    $region53: #{tpu_custom_call.1} parent=1 // pred_fallthru
      _
    %1008 = vsyncpa [#allocation3], 1
    %1009 = vsyncpa [#allocation6], 1
    %1010 = vsyncpa [#allocation9], 1
    %1011 = vsyncpa [#allocation4], 1

</llo_original>
